<compile_context>
chip_gen: v6e
topology: v6e:2x2x1
jax: 0.10.0
libtpu: 0.0.40
codegen_flags: <defaults>
</compile_context>

<pallas_src>
import functools
import math

import jax
import jax.numpy as jnp
from jax.experimental import pallas as pl
from jax.experimental.pallas import tpu as pltpu

_LANE = 256   # MXU lane dim on v6e/v7x; multiple of the 128-lane vreg (v5e OK)
_SUB = 8      # sublane granularity


def _round_up(x, m):
    return (x + m - 1) // m * m


# ----------------------------------------------------------------------------
# dilate(): pure permute/reshape glue from pytorch-wavenet (no compute).
# ----------------------------------------------------------------------------
def dilate(x, dilation, init_dilation=1, pad_start=True):
    n, c, l = x.shape
    if dilation == init_dilation:
        return x
    dilation_factor = dilation / init_dilation
    new_l = int(math.ceil(l / dilation_factor) * dilation_factor)
    if new_l != l:
        pad = new_l - l
        cfg = ((0, 0), (0, 0), (pad, 0) if pad_start else (0, pad))
        x = jnp.pad(x, cfg)
        l = new_l
    l_new = int(math.ceil(l * init_dilation / dilation))
    n_new = int(math.ceil(n * dilation / init_dilation))
    x = jnp.transpose(x, (1, 2, 0)).reshape(c, l_new, n_new)
    return jnp.transpose(x, (2, 0, 1))


# ----------------------------------------------------------------------------
# Fused residual-block kernel (lane-dense slabs, no in-kernel layout work).
# ----------------------------------------------------------------------------
def _residual_block_kernel(xcol_ref, xres_ref, wfg_ref, bfg_ref, wsr_ref,
                           bsr_ref, out_ref, skip_ref, *,
                           C_dil_p, C_skip_p, C_skip):
    # xcol_ref : (K*C_res, T)        im2col activations (all K taps in rows)
    # xres_ref : (C_res,   T)  f32   packed residual term x[:, :, K-1:]
    # wfg_ref  : (2*C_dil_p, K*C_res)   [filter; gate] weights
    # bfg_ref  : (2*C_dil_p, 1) f32
    # wsr_ref  : (C_skip_p + C_res, C_dil_p)   [skip; res] 1x1 weights
    # bsr_ref  : (C_skip_p + C_res, 1) f32
    # out_ref  : (C_res, T),  skip_ref : (C_skip, T)
    mm_dtype = wfg_ref.dtype

    # filter_conv + gate_conv fused: ONE lane-dense MXU dot, f32 accumulation.
    pre = jnp.dot(wfg_ref[...], xcol_ref[...],
                  preferred_element_type=jnp.float32) + bfg_ref[...]
    filt = jnp.tanh(pre[:C_dil_p, :])                        # EUP
    gate = 0.5 * (jnp.tanh(0.5 * pre[C_dil_p:, :]) + 1.0)    # EUP sigmoid
    hidden = filt * gate                                     # (C_dil_p, T) f32

    # skip_conv (1x1) + res_conv (1x1) fused: ONE MXU dot.
    sr = jnp.dot(wsr_ref[...], hidden.astype(mm_dtype),
                 preferred_element_type=jnp.float32) + bsr_ref[...]

    skip_ref[...] = sr[:C_skip, :].astype(skip_ref.dtype)
    out_ref[...] = (sr[C_skip_p:, :] + xres_ref[...]).astype(out_ref.dtype)


# ----------------------------------------------------------------------------
# Wrapper: weight repacking + lane-dense activation packing + pallas_call.
# ----------------------------------------------------------------------------
def residual_block_forward(x, params, *, kernel_size, dilation, init_dilation,
                           mxu_dtype=jnp.bfloat16, lane_tile=1024):
    """params = (wf, bf, wg, bg, ws, bs, wr, br) in PyTorch Conv1d layout."""
    wf, bf, wg, bg, ws, bs, wr, br = params
    K = kernel_size

    # module-spec reshape glue (no compute).
    x = dilate(x, dilation, init_dilation)
    Nd, C_res, Ld = x.shape
    C_dil = wf.shape[0]
    C_skip = ws.shape[0]
    Lout = Ld - (K - 1)

    # sublane-aligned channel blocks (zero-weight / zero-bias padding).
    C_dil_p = _round_up(C_dil, _SUB)
    C_skip_p = _round_up(C_skip, _SUB)

    # ---- one-time weight repacking ------------------------------------------
    def w_im2col(w, rows):                 # (C_out, C_in, K) -> (rows, K*C_in)
        w2 = jnp.transpose(w, (0, 2, 1)).reshape(w.shape[0], -1)
        return jnp.pad(w2, ((0, rows - w.shape[0]), (0, 0)))

    def pad_vec(b, rows):
        return jnp.pad(b, (0, rows - b.shape[0]))

    wfg = jnp.concatenate([w_im2col(wf, C_dil_p), w_im2col(wg, C_dil_p)],
                          axis=0).astype(mxu_dtype)
    bfg = jnp.concatenate([pad_vec(bf, C_dil_p), pad_vec(bg, C_dil_p)]
                          ).reshape(-1, 1).astype(jnp.float32)
    ws2 = jnp.pad(ws[:, :, 0], ((0, C_skip_p - C_skip), (0, C_dil_p - C_dil)))
    wr2 = jnp.pad(wr[:, :, 0], ((0, 0), (0, C_dil_p - C_dil)))
    wsr = jnp.concatenate([ws2, wr2], axis=0).astype(mxu_dtype)
    bsr = jnp.concatenate([pad_vec(bs, C_skip_p), br]
                          ).reshape(-1, 1).astype(jnp.float32)

    # ---- lane-dense activation packing (wrapper-side layout plumbing) --------
    def pack_lanes(a):                     # (Nd, C, L) -> (C, Nd*L)
        return jnp.transpose(a, (1, 0, 2)).reshape(a.shape[1], -1)

    P = Nd * Lout
    lane_tile = _round_up(max(int(lane_tile), _LANE), _LANE)
    tile = min(lane_tile, _round_up(P, _LANE))
    P_pad = _round_up(P, tile)

    # im2col: row index = k*C_res + ci, column index = n*Lout + t.  All K taps
    # sit in the contraction axis, so lane tiles need no halo.
    xcol = jnp.concatenate([pack_lanes(x[:, :, k:k + Lout]) for k in range(K)],
                           axis=0)
    xres = pack_lanes(x[:, :, K - 1:])      # residual term, kept in x.dtype
    if P_pad != P:
        xcol = jnp.pad(xcol, ((0, 0), (0, P_pad - P)))
        xres = jnp.pad(xres, ((0, 0), (0, P_pad - P)))
    xcol = xcol.astype(mxu_dtype)

    # ---- explicit VMEM budget: tile + double-buffering headroom --------------
    mxu_b = jnp.dtype(mxu_dtype).itemsize
    act_b = jnp.dtype(x.dtype).itemsize
    in_bytes = tile * (xcol.shape[0] * mxu_b + C_res * act_b)
    out_bytes = tile * (C_res + C_skip) * act_b
    tmp_bytes = tile * (3 * C_dil_p + C_skip_p + C_res) * 4
    w_bytes = (wfg.size + wsr.size) * mxu_b + (bfg.size + bsr.size) * 4
    vmem_limit = int(2 * (in_bytes + out_bytes + w_bytes) + 2 * tmp_bytes
                     + (4 << 20))
    vmem_limit = min(max(vmem_limit, 8 << 20), 100 << 20)

    kernel = functools.partial(_residual_block_kernel, C_dil_p=C_dil_p,
                               C_skip_p=C_skip_p, C_skip=C_skip)

    out_slab, skip_slab = pl.pallas_call(
        kernel,
        out_shape=(jax.ShapeDtypeStruct((C_res, P_pad), x.dtype),
                   jax.ShapeDtypeStruct((C_skip, P_pad), x.dtype)),
        grid=(P_pad // tile,),
        in_specs=[
            pl.BlockSpec((xcol.shape[0], tile), lambda i: (0, i)),
            pl.BlockSpec((C_res, tile), lambda i: (0, i)),
            pl.BlockSpec(wfg.shape, lambda i: (0, 0)),   # VMEM-resident weights
            pl.BlockSpec(bfg.shape, lambda i: (0, 0)),
            pl.BlockSpec(wsr.shape, lambda i: (0, 0)),
            pl.BlockSpec(bsr.shape, lambda i: (0, 0)),
        ],
        out_specs=(
            pl.BlockSpec((C_res, tile), lambda i: (0, i)),
            pl.BlockSpec((C_skip, tile), lambda i: (0, i)),
        ),
        compiler_params=pltpu.CompilerParams(
            dimension_semantics=("parallel",),       # shard lane tiles across TCs
            vmem_limit_bytes=vmem_limit),
    )(xcol, xres, wfg, bfg, wsr, bsr)

    # un-pack lane-dense slabs back to (Nd, C, Lout): pure reshape plumbing.
    def unpack_lanes(slab, c):
        return jnp.transpose(slab[:, :P].reshape(c, Nd, Lout), (1, 0, 2))

    outputs = unpack_lanes(out_slab, C_res)
    skip_pre = unpack_lanes(skip_slab, C_skip)

    # skip_conv is pointwise over (n, t), so it commutes with the reshape-only
    # batch undilation; apply dilate() to the fused skip output afterwards.
    if Lout != 1:
        skip_out = dilate(skip_pre, 1, init_dilation=dilation)
    else:
        skip_out = skip_pre
    return outputs, skip_out


# ----------------------------------------------------------------------------
# Pure-JAX reference (mirrors the PyTorch forward line-by-line).
# ----------------------------------------------------------------------------
def _conv1d_ref(x, w, b):
    Kw = w.shape[-1]
    Lo = x.shape[-1] - (Kw - 1)
    acc = jnp.zeros((x.shape[0], w.shape[0], Lo), jnp.float32)
    for k in range(Kw):
        acc = acc + jnp.einsum('oc,ncl->nol', w[:, :, k], x[:, :, k:k + Lo],
                               precision=jax.lax.Precision.HIGHEST)
    return acc + b[None, :, None]


def _reference(x, params, *, kernel_size, dilation, init_dilation):
    wf, bf, wg, bg, ws, bs, wr, br = params
    x = dilate(x, dilation, init_dilation)
    gate = jax.nn.sigmoid(_conv1d_ref(x, wg, bg))
    filt = jnp.tanh(_conv1d_ref(x, wf, bf))
    hidden = gate * filt
    skip = hidden
    if hidden.shape[2] != 1:
        skip = dilate(hidden, 1, init_dilation=dilation)
    skip_out = _conv1d_ref(skip, ws, bs)
    res_out = _conv1d_ref(hidden, wr, br)
    outputs = res_out + x[:, :, kernel_size - 1:]
    return outputs, skip_out


if __name__ == "__main__":
    # Module config: res_channels=4, dilation_channels=8, skip_channels=16,
    # kernel_size=2, bias=True; forward(inputs, dilation=2, init_dilation=1).
    N, C_res, C_dil, C_skip, L, K = 2, 4, 8, 16, 16, 2
    dilation, init_dilation = 2, 1

    keys = jax.random.split(jax.random.PRNGKey(0), 9)
    x = jax.random.normal(keys[0], (N, C_res, L), dtype=jnp.float32)
    wf = jax.random.normal(keys[1], (C_dil, C_res, K), jnp.float32) * 0.3
    bf = jax.random.normal(keys[2], (C_dil,), jnp.float32) * 0.1
    wg = jax.random.normal(keys[3], (C_dil, C_res, K), jnp.float32) * 0.3
    bg = jax.random.normal(keys[4], (C_dil,), jnp.float32) * 0.1
    ws = jax.random.normal(keys[5], (C_skip, C_dil, 1), jnp.float32) * 0.3
    bs = jax.random.normal(keys[6], (C_skip,), jnp.float32) * 0.1
    wr = jax.random.normal(keys[7], (C_res, C_dil, 1), jnp.float32) * 0.3
    br = jax.random.normal(keys[8], (C_res,), jnp.float32) * 0.1
    params = (wf, bf, wg, bg, ws, bs, wr, br)

    out_ref, skip_ref = _reference(
        x, params, kernel_size=K, dilation=dilation, init_dilation=init_dilation)

    # Default path: bf16 MXU operands, f32 accumulation (right choice on v5e
    # where the MXU has no native f32 path; also fastest on v6e/v7x).
    out, skip = residual_block_forward(
        x, params, kernel_size=K, dilation=dilation, init_dilation=init_dilation)
    out, skip = jax.block_until_ready((out, skip))
    assert out.shape == out_ref.shape and skip.shape == skip_ref.shape
    assert float(jnp.max(jnp.abs(out - out_ref))) < 1e-1, "bf16 outputs mismatch"
    assert float(jnp.max(jnp.abs(skip - skip_ref))) < 1e-1, "bf16 skip mismatch"

    # f32-operand path (tighter numerical check of the fused kernel).
    out32, skip32 = residual_block_forward(
        x, params, kernel_size=K, dilation=dilation, init_dilation=init_dilation,
        mxu_dtype=jnp.float32)
    out32, skip32 = jax.block_until_ready((out32, skip32))
    assert float(jnp.max(jnp.abs(out32 - out_ref))) < 2e-2, "outputs mismatch"
    assert float(jnp.max(jnp.abs(skip32 - skip_ref))) < 2e-2, "skip_out mismatch"

    print("KERNEL_OK")
</pallas_src>

<mosaic_0001>
module attributes {stable_mosaic.version = 11 : i64} {
  func.func @_residual_block_kernel(%arg0: i32, %arg1: memref<8x256xbf16, #tpu.memory_space<vmem>>, %arg2: memref<4x256xf32, #tpu.memory_space<vmem>>, %arg3: memref<16x8xbf16, #tpu.memory_space<vmem>>, %arg4: memref<16x1xf32, #tpu.memory_space<vmem>>, %arg5: memref<20x8xbf16, #tpu.memory_space<vmem>>, %arg6: memref<20x1xf32, #tpu.memory_space<vmem>>, %arg7: memref<4x256xf32, #tpu.memory_space<vmem>>, %arg8: memref<16x256xf32, #tpu.memory_space<vmem>>) attributes {dimension_semantics = [#tpu.dimension_semantics<parallel>], iteration_bounds = array<i64: 1>, scalar_prefetch = 0 : i64, scratch_operands = 0 : i64, tpu.core_type = #tpu.core_type<tc>, window_params = [{transform_indices = @transform_0, window_bounds = array<i64: 8, 256>}, {transform_indices = @transform_1, window_bounds = array<i64: 4, 256>}, {pipeline_mode = #tpu.pipeline_mode<synchronous>, transform_indices = @transform_2, window_bounds = array<i64: 16, 8>}, {pipeline_mode = #tpu.pipeline_mode<synchronous>, transform_indices = @transform_3, window_bounds = array<i64: 16, 1>}, {pipeline_mode = #tpu.pipeline_mode<synchronous>, transform_indices = @transform_4, window_bounds = array<i64: 20, 8>}, {pipeline_mode = #tpu.pipeline_mode<synchronous>, transform_indices = @transform_5, window_bounds = array<i64: 20, 1>}, {transform_indices = @transform_6, window_bounds = array<i64: 4, 256>}, {transform_indices = @transform_7, window_bounds = array<i64: 16, 256>}]} {
    %c0 = arith.constant 0 : index
    %c0_0 = arith.constant 0 : index
    %0 = vector.load %arg3[%c0, %c0_0] : memref<16x8xbf16, #tpu.memory_space<vmem>>, vector<16x8xbf16>
    %c0_1 = arith.constant 0 : index
    %c0_2 = arith.constant 0 : index
    %1 = vector.load %arg1[%c0_1, %c0_2] : memref<8x256xbf16, #tpu.memory_space<vmem>>, vector<8x256xbf16>
    %cst = arith.constant dense<0.000000e+00> : vector<16x256xf32>
    %2 = tpu.matmul %0, %1, %cst {dimension_numbers = #tpu.dot_dimension_numbers<[1], [0], [0], [1], [0, 0, 1, 1], [], []>} : vector<16x8xbf16>, vector<8x256xbf16>, vector<16x256xf32> -> vector<16x256xf32>
    %c0_3 = arith.constant 0 : index
    %c0_4 = arith.constant 0 : index
    %3 = vector.load %arg4[%c0_3, %c0_4] : memref<16x1xf32, #tpu.memory_space<vmem>>, vector<16x1xf32>
    %4 = vector.broadcast %3 : vector<16x1xf32> to vector<16x256xf32>
    %5 = arith.addf %2, %4 : vector<16x256xf32>
    %6 = vector.extract_strided_slice %5 {offsets = [0, 0], sizes = [8, 256], strides = [1, 1]} : vector<16x256xf32> to vector<8x256xf32>
    %7 = math.tanh %6 : vector<8x256xf32>
    %8 = vector.extract_strided_slice %5 {offsets = [8, 0], sizes = [8, 256], strides = [1, 1]} : vector<16x256xf32> to vector<8x256xf32>
    %cst_5 = arith.constant 5.000000e-01 : f32
    %9 = vector.broadcast %cst_5 : f32 to vector<8x256xf32>
    %10 = arith.mulf %9, %8 : vector<8x256xf32>
    %11 = math.tanh %10 : vector<8x256xf32>
    %cst_6 = arith.constant 1.000000e+00 : f32
    %12 = vector.broadcast %cst_6 : f32 to vector<8x256xf32>
    %13 = arith.addf %11, %12 : vector<8x256xf32>
    %cst_7 = arith.constant 5.000000e-01 : f32
    %14 = vector.broadcast %cst_7 : f32 to vector<8x256xf32>
    %15 = arith.mulf %14, %13 : vector<8x256xf32>
    %16 = arith.mulf %7, %15 : vector<8x256xf32>
    %c0_8 = arith.constant 0 : index
    %c0_9 = arith.constant 0 : index
    %17 = vector.load %arg5[%c0_8, %c0_9] : memref<20x8xbf16, #tpu.memory_space<vmem>>, vector<20x8xbf16>
    %18 = arith.truncf %16 : vector<8x256xf32> to vector<8x256xbf16>
    %cst_10 = arith.constant dense<0.000000e+00> : vector<20x256xf32>
    %19 = tpu.matmul %17, %18, %cst_10 {dimension_numbers = #tpu.dot_dimension_numbers<[1], [0], [0], [1], [0, 0, 1, 1], [], []>} : vector<20x8xbf16>, vector<8x256xbf16>, vector<20x256xf32> -> vector<20x256xf32>
    %c0_11 = arith.constant 0 : index
    %c0_12 = arith.constant 0 : index
    %20 = vector.load %arg6[%c0_11, %c0_12] : memref<20x1xf32, #tpu.memory_space<vmem>>, vector<20x1xf32>
    %21 = vector.broadcast %20 : vector<20x1xf32> to vector<20x256xf32>
    %22 = arith.addf %19, %21 : vector<20x256xf32>
    %23 = vector.extract_strided_slice %22 {offsets = [0, 0], sizes = [16, 256], strides = [1, 1]} : vector<20x256xf32> to vector<16x256xf32>
    %c0_13 = arith.constant 0 : index
    %c0_14 = arith.constant 0 : index
    %24 = vector.load %arg8[%c0_13, %c0_14] : memref<16x256xf32, #tpu.memory_space<vmem>>, vector<16x256xf32>
    tpu.vector_store %arg8[%c0_13, %c0_14], %23 {strides = array<i32>} : memref<16x256xf32, #tpu.memory_space<vmem>>, vector<16x256xf32>,
    %25 = vector.extract_strided_slice %22 {offsets = [16, 0], sizes = [4, 256], strides = [1, 1]} : vector<20x256xf32> to vector<4x256xf32>
    %c0_15 = arith.constant 0 : index
    %c0_16 = arith.constant 0 : index
    %26 = vector.load %arg2[%c0_15, %c0_16] : memref<4x256xf32, #tpu.memory_space<vmem>>, vector<4x256xf32>
    %27 = arith.addf %25, %26 : vector<4x256xf32>
    %c0_17 = arith.constant 0 : index
    %c0_18 = arith.constant 0 : index
    %28 = vector.load %arg7[%c0_17, %c0_18] : memref<4x256xf32, #tpu.memory_space<vmem>>, vector<4x256xf32>
    tpu.vector_store %arg7[%c0_17, %c0_18], %27 {strides = array<i32>} : memref<4x256xf32, #tpu.memory_space<vmem>>, vector<4x256xf32>,
    return
  }
  func.func @transform_0(%arg0: i32) -> (i32, i32) {
    %c0_i32 = arith.constant 0 : i32
    %c0_i32_0 = arith.constant 0 : i32
    return %c0_i32, %arg0 : i32, i32
  }
  func.func @transform_1(%arg0: i32) -> (i32, i32) {
    %c0_i32 = arith.constant 0 : i32
    %c0_i32_0 = arith.constant 0 : i32
    return %c0_i32, %arg0 : i32, i32
  }
  func.func @transform_2(%arg0: i32) -> (i32, i32) {
    %c0_i32 = arith.constant 0 : i32
    %c0_i32_0 = arith.constant 0 : i32
    %c0_i32_1 = arith.constant 0 : i32
    return %c0_i32, %c0_i32_0 : i32, i32
  }
  func.func @transform_3(%arg0: i32) -> (i32, i32) {
    %c0_i32 = arith.constant 0 : i32
    %c0_i32_0 = arith.constant 0 : i32
    %c0_i32_1 = arith.constant 0 : i32
    return %c0_i32, %c0_i32_0 : i32, i32
  }
  func.func @transform_4(%arg0: i32) -> (i32, i32) {
    %c0_i32 = arith.constant 0 : i32
    %c0_i32_0 = arith.constant 0 : i32
    %c0_i32_1 = arith.constant 0 : i32
    return %c0_i32, %c0_i32_0 : i32, i32
  }
  func.func @transform_5(%arg0: i32) -> (i32, i32) {
    %c0_i32 = arith.constant 0 : i32
    %c0_i32_0 = arith.constant 0 : i32
    %c0_i32_1 = arith.constant 0 : i32
    return %c0_i32, %c0_i32_0 : i32, i32
  }
  func.func @transform_6(%arg0: i32) -> (i32, i32) {
    %c0_i32 = arith.constant 0 : i32
    %c0_i32_0 = arith.constant 0 : i32
    return %c0_i32, %arg0 : i32, i32
  }
  func.func @transform_7(%arg0: i32) -> (i32, i32) {
    %c0_i32 = arith.constant 0 : i32
    %c0_i32_0 = arith.constant 0 : i32
    return %c0_i32, %arg0 : i32, i32
  }
}

</mosaic_0001>

<llo_original>
// kernel: tpu_custom_call.1
$region0: #{tpu_custom_call.1}
  #allocation0 [shape = 'u32[]', space=smem, size = 0x4, offset = 0x4, fixed_abs, tag = 'smem constant byte address 0x4 - core index']
  #allocation1 [shape = 'u32[144,128]{1,0:T(1,128)}', space=vmem, size = 0x12000, scoped, tag = 'internal scratch']
  %s0 = inlined_call_operand.vmem [shape: bf16[8,256], index: 0, kind: input, shape index: {}]
  %s1 = inlined_call_operand.vmem [shape: f32[4,256], index: 1, kind: input, shape index: {}]
  %s2 = inlined_call_operand.vmem [shape: bf16[16,8], index: 2, kind: input, shape index: {}]
  %s3 = inlined_call_operand.vmem [shape: f32[16,1], index: 3, kind: input, shape index: {}]
  %s4 = inlined_call_operand.vmem [shape: bf16[20,8], index: 4, kind: input, shape index: {}]
  %s5 = inlined_call_operand.vmem [shape: f32[20,1], index: 5, kind: input, shape index: {}]
  %s6 = inlined_call_operand.hbm [shape: f32[4,256], index: 6, kind: output, shape index: {0}]
  %s7 = inlined_call_operand.hbm [shape: f32[16,256], index: 7, kind: output, shape index: {1}]
  %8 = xla_tuple %s6, %s7
  %s9 = sld [smem:[#allocation0]]
  $region42: #{tpu_custom_call.1} parent=0
    _
  %s11 = ssub.s32 1, %s9
  %s12 = scalar_select 0, %s11, %s9
  $region1: #{tpu_custom_call.1} parent=0
    #allocation2 [shape = 'u8[4096]{0}', space=vmem, size = 0x1000, scoped, tag = 'output window, operand 0, single buffered']
    #allocation3 [shape = 's32[1]{0}', space=sflag, size = 0x4, scoped, tag = 'scoped memory for tpu_custom_call.1']
    #allocation4 [shape = 'u8[16384]{0}', space=vmem, size = 0x4000, scoped, tag = 'output window, operand 1, single buffered']
    #allocation5 [shape = 's32[1]{0}', space=sflag, size = 0x4, scoped, tag = 'scoped memory for tpu_custom_call.1']
    %13 = vsyncpa [#allocation3], 0
    %14 = vsyncpa [#allocation5], 0
    // Predicated region
    $region2: #{tpu_custom_call.1} parent=1 // pred_check
      _
    $region3: #{tpu_custom_call.1} parent=1 // pred_check_branch
      %16 = sbr.rel (0) target = $region5
    $region4: #{tpu_custom_call.1} parent=1 // pred_region
      _
    $region5: #{tpu_custom_call.1} parent=1 // pred_fallthru
      _
    // Predicated region
    $region6: #{tpu_custom_call.1} parent=1 // pred_check
      _
    $region7: #{tpu_custom_call.1} parent=1 // pred_check_branch
      %18 = sbr.rel (0) target = $region9
    $region8: #{tpu_custom_call.1} parent=1 // pred_region
      _
    $region9: #{tpu_custom_call.1} parent=1 // pred_fallthru
      _
    // Predicated region
    $region10: #{tpu_custom_call.1} parent=1 // pred_check
      _
    $region11: #{tpu_custom_call.1} parent=1 // pred_check_branch
      %20 = sbr.rel (0) target = $region13
    $region12: #{tpu_custom_call.1} parent=1 // pred_region
      _
    $region13: #{tpu_custom_call.1} parent=1 // pred_fallthru
      _
    // Predicated region
    $region14: #{tpu_custom_call.1} parent=1 // pred_check
      _
    $region15: #{tpu_custom_call.1} parent=1 // pred_check_branch
      %22 = sbr.rel (0) target = $region17
    $region16: #{tpu_custom_call.1} parent=1 // pred_region
      _
    $region17: #{tpu_custom_call.1} parent=1 // pred_fallthru
      _
    // Predicated region
    $region18: #{tpu_custom_call.1} parent=1 // pred_check
      _
    $region19: #{tpu_custom_call.1} parent=1 // pred_check_branch
      %24 = sbr.rel (0) target = $region21
    $region20: #{tpu_custom_call.1} parent=1 // pred_region
      _
    $region21: #{tpu_custom_call.1} parent=1 // pred_fallthru
      _
    // Predicated region
    $region22: #{tpu_custom_call.1} parent=1 // pred_check
      _
    $region23: #{tpu_custom_call.1} parent=1 // pred_check_branch
      %26 = sbr.rel (0) target = $region25
    $region24: #{tpu_custom_call.1} parent=1 // pred_region
      _
    $region25: #{tpu_custom_call.1} parent=1 // pred_fallthru
      _
    %v28 = vld [vmem:[%s2] sm:$0xf]
    %v29 = vld [vmem:[%s2 + $0x4] sm:$0xf]
    %v30 = vld [vmem:[%s0] sm:$0xff]
    %v31 = vld [vmem:[%s3] sm:$0xff]
    %v32 = vld [vmem:[%s3 + $0x8] sm:$0xff]
    %34 = vset.pattern.permute.xlu0 0
    %35 = vperm.xlu0 %34, %v31
    %v36 = vpop.permute.xlu0 %35
    %39 = vset.pattern.permute.xlu0 0
    %40 = vperm.xlu0 %39, %v32
    %v41 = vpop.permute.xlu0 %40
    %v45 = vunpack.c.l.b16 %v28
    %v46 = vunpack.c.l.b16 %v29
    %v47 = vpack.c.b16 %v46, %v45
    %v49 = vunpack.c.l.b16 %v30
    %v50 = vunpack.c.h.b16 %v30
    %v51 = vpack.c.b16 %v49, %v49
    %v52 = vpack.c.b16 %v50, %v50
    %vm53 = vcmask 64512
    %v55 = vsel %vm53, %v47, 0
    %vm57 = vcmask 1043456
    %v59 = vsel %vm57, %v51, 0
    %v62 = vsel %vm57, %v52, 0
    %64 = vmatprep.subr.bf16.mxu0 0
    %65 = vmatpush1.bf16.msra.mxu0 0
    %66 = vmatprep.subr.bf16.mxu0 0
    %67 = vmatpush1.bf16.msra.mxu0 0
    %68 = vmatprep.subr.bf16.mxu0 0
    %69 = vmatpush1.bf16.msra.mxu0 0
    %70 = vmatprep.subr.bf16.mxu0 0
    %71 = vmatpush1.bf16.msra.mxu0 0
    %72 = vmatprep.subr.bf16.mxu0 0
    %73 = vmatpush1.bf16.msra.mxu0 0
    %74 = vmatprep.subr.bf16.mxu0 0
    %75 = vmatpush1.bf16.msra.mxu0 0
    %76 = vmatprep.subr.bf16.mxu0 0
    %77 = vmatpush1.bf16.msra.mxu0 0
    %78 = vmatprep.subr.bf16.mxu0 %v62
    %79 = vmatpush1.bf16.msra.mxu0 %v59
    %80 = vmatprep.subr.bf16.mxu0 0
    %81 = vmatpush2.bf16.msra.mxu0 0
    %82 = vmatprep.subr.bf16.mxu0 0
    %83 = vmatpush2.bf16.msra.mxu0 0
    %84 = vmatprep.subr.bf16.mxu0 0
    %85 = vmatpush2.bf16.msra.mxu0 0
    %86 = vmatprep.subr.bf16.mxu0 0
    %87 = vmatpush2.bf16.msra.mxu0 0
    %88 = vmatprep.subr.bf16.mxu0 0
    %89 = vmatpush2.bf16.msra.mxu0 0
    %90 = vmatprep.subr.bf16.mxu0 0
    %91 = vmatpush2.bf16.msra.mxu0 0
    %92 = vmatprep.subr.bf16.mxu0 0
    %93 = vmatpush2.bf16.msra.mxu0 0
    %94 = vmatprep.subr.bf16.mxu0 0
    %95 = vmatpush2.bf16.msra.mxu0 0
    %96 = vmatprep.mubr.bf16.mxu0 0
    %97 = vmatmul.mubr.bf16.gmra.mxu0 %v55
    %v98 = vpop.f32.mrf.mxu0
    %v99 = vadd.f32 %v36, %v98
    %v100 = vpop.f32.mrf.mxu0
    %v101 = vadd.f32 %v36, %v100
    %v102 = vpop.f32.mrf.mxu0
    %v103 = vadd.f32 %v41, %v102
    %v104 = vpop.f32.mrf.mxu0
    %v105 = vadd.f32 %v41, %v104
    %106 = vdwg.mxu0
    %v107 = vtanh.pop %v99
    %v108 = vtanh.pop %v101
    %v109 = vmul.f32 %v103, 0.5
    %v110 = vmul.f32 %v105, 0.5
    %v111 = vtanh.pop %v109
    %v112 = vtanh.pop %v110
    %v113 = vadd.f32 %v111, 1.0
    %v114 = vadd.f32 %v112, 1.0
    %v115 = vmul.f32 %v113, 0.5
    %v116 = vmul.f32 %v114, 0.5
    %v117 = vmul.f32 %v107, %v115
    %v118 = vmul.f32 %v108, %v116
    %v119 = vld [vmem:[%s4] sm:$0xf]
    %v120 = vld [vmem:[%s4 + $0x4] sm:$0xf]
    %v121 = vld [vmem:[%s4 + $0x8] sm:$0x3]
    %v122 = vpack.c.bf16 %v117, %v117
    %v123 = vpack.c.bf16 %v118, %v118
    %v124 = vld [vmem:[%s5] sm:$0xff]
    %v125 = vld [vmem:[%s5 + $0x8] sm:$0xff]
    %v126 = vld [vmem:[%s5 + $0x10] sm:$0xf]
    %128 = vset.pattern.permute.xlu0 0
    %129 = vperm.xlu0 %128, %v124
    %v130 = vpop.permute.xlu0 %129
    %133 = vset.pattern.permute.xlu0 0
    %134 = vperm.xlu0 %133, %v125
    %v135 = vpop.permute.xlu0 %134
    %138 = vset.pattern.permute.xlu0 0
    %139 = vperm.xlu0 %138, %v126
    %v140 = vpop.permute.xlu0 %139
    %v145 = vunpack.c.l.b16 %v119
    %v146 = vunpack.c.l.b16 %v120
    %v147 = vunpack.c.l.b16 %v121
    %v148 = vpack.c.b16 %v146, %v145
    %v149 = vpack.c.b16 %v147, %v147
    %v151 = vsel %vm53, %v148, 0
    %v154 = vsel %vm53, %v149, 0
    %v157 = vsel %vm57, %v122, 0
    %v160 = vsel %vm57, %v123, 0
    %162 = vmatprep.subr.bf16.mxu0 0
    %163 = vmatpush1.bf16.msra.mxu0 0
    %164 = vmatprep.subr.bf16.mxu0 0
    %165 = vmatpush1.bf16.msra.mxu0 0
    %166 = vmatprep.subr.bf16.mxu0 0
    %167 = vmatpush1.bf16.msra.mxu0 0
    %168 = vmatprep.subr.bf16.mxu0 0
    %169 = vmatpush1.bf16.msra.mxu0 0
    %170 = vmatprep.subr.bf16.mxu0 0
    %171 = vmatpush1.bf16.msra.mxu0 0
    %172 = vmatprep.subr.bf16.mxu0 0
    %173 = vmatpush1.bf16.msra.mxu0 0
    %174 = vmatprep.subr.bf16.mxu0 0
    %175 = vmatpush1.bf16.msra.mxu0 0
    %176 = vmatprep.subr.bf16.mxu0 %v160
    %177 = vmatpush1.bf16.msra.mxu0 %v157
    %178 = vmatprep.subr.bf16.mxu0 0
    %179 = vmatpush2.bf16.msra.mxu0 0
    %180 = vmatprep.subr.bf16.mxu0 0
    %181 = vmatpush2.bf16.msra.mxu0 0
    %182 = vmatprep.subr.bf16.mxu0 0
    %183 = vmatpush2.bf16.msra.mxu0 0
    %184 = vmatprep.subr.bf16.mxu0 0
    %185 = vmatpush2.bf16.msra.mxu0 0
    %186 = vmatprep.subr.bf16.mxu0 0
    %187 = vmatpush2.bf16.msra.mxu0 0
    %188 = vmatprep.subr.bf16.mxu0 0
    %189 = vmatpush2.bf16.msra.mxu0 0
    %190 = vmatprep.subr.bf16.mxu0 0
    %191 = vmatpush2.bf16.msra.mxu0 0
    %192 = vmatprep.subr.bf16.mxu0 0
    %193 = vmatpush2.bf16.msra.mxu0 0
    %194 = vmatprep.mubr.bf16.mxu0 0
    %195 = vmatmul.mubr.bf16.gmra.mxu0 %v151
    %v196 = vpop.f32.mrf.mxu0
    %v197 = vadd.f32 %v130, %v196
    %v198 = vpop.f32.mrf.mxu0
    %v199 = vadd.f32 %v130, %v198
    %v200 = vpop.f32.mrf.mxu0
    %v201 = vadd.f32 %v135, %v200
    %v202 = vpop.f32.mrf.mxu0
    %v203 = vadd.f32 %v135, %v202
    %204 = vmatprep.mubr.bf16.mxu0 0
    %205 = vmatmul.mubr.bf16.gmra.mxu0 %v154
    %v206 = vpop.f32.mrf.mxu0
    %v207 = vadd.f32 %v140, %v206
    %v208 = vpop.f32.mrf.mxu0
    %v209 = vadd.f32 %v140, %v208
    %v210 = vpop.f32.mrf.mxu0
    %v211 = vpop.f32.mrf.mxu0
    %212 = vdwg.mxu0
    %213 = vst [vmem:[#allocation4] sm:$0xff] %v197
    %214 = vst [vmem:[#allocation4 + $0x8] sm:$0xff] %v199
    %215 = vst [vmem:[#allocation4 + $0x10] sm:$0xff] %v201
    %216 = vst [vmem:[#allocation4 + $0x18] sm:$0xff] %v203
    %v217 = vld [vmem:[%s1] sm:$0xff]
    %v219 = vcombine.high %v217, %v217
    %v221 = vadd.f32 %v207, %v217
    %v222 = vadd.f32 %v209, %v219
    %v225 = vcombine.low %v221, %v222
    %227 = vst [vmem:[#allocation2] sm:$0xff] %v225
    // Predicated region
    $region26: #{tpu_custom_call.1} parent=1 // pred_check
      _
    $region27: #{tpu_custom_call.1} parent=1 // pred_check_branch
      %229 = sbr.rel (0) target = $region29
    $region28: #{tpu_custom_call.1} parent=1 // pred_region
      %s231 = ssub.s32 128, 128
      %232 = vsyncadd [#allocation3], %s231
      %s234 = sshll.u32 [#allocation2], 4
      %s235 = int_to_ptr.vmem [resolvable:$true] %s234
      %237 = dma.vmem_to_hbm [thread:$0]  %s235, 128, %s6, [#allocation3]
    $region29: #{tpu_custom_call.1} parent=1 // pred_fallthru
      _
    // Predicated region
    $region30: #{tpu_custom_call.1} parent=1 // pred_check
      _
    $region31: #{tpu_custom_call.1} parent=1 // pred_check_branch
      %239 = sbr.rel (0) target = $region33
    $region32: #{tpu_custom_call.1} parent=1 // pred_region
      %s241 = ssub.s32 512, 512
      %242 = vsyncadd [#allocation5], %s241
      %s243 = sshll.u32 [#allocation4], 4
      %s244 = int_to_ptr.vmem [resolvable:$true] %s243
      %249 = dma.vmem_to_hbm [thread:$0]  %s244, 512, %s7, [#allocation5], 256, 256, 16
    $region33: #{tpu_custom_call.1} parent=1 // pred_fallthru
      _
    // Predicated region
    $region34: #{tpu_custom_call.1} parent=1 // pred_check
      _
    $region35: #{tpu_custom_call.1} parent=1 // pred_check_branch
      %251 = sbr.rel (0) target = $region37
    $region36: #{tpu_custom_call.1} parent=1 // pred_region
      %252 = dma.done [#allocation3], 128
    $region37: #{tpu_custom_call.1} parent=1 // pred_fallthru
      _
    // Predicated region
    $region38: #{tpu_custom_call.1} parent=1 // pred_check
      _
    $region39: #{tpu_custom_call.1} parent=1 // pred_check_branch
      %254 = sbr.rel (0) target = $region41
    $region40: #{tpu_custom_call.1} parent=1 // pred_region
      %255 = dma.done [#allocation5], 512
    $region41: #{tpu_custom_call.1} parent=1 // pred_fallthru
      _
    %256 = vsyncpa [#allocation3], 1
    %257 = vsyncpa [#allocation5], 1

</llo_original>
